<compile_context>
chip_gen: v5e
topology: v5e:2x2
jax: 0.10.0
libtpu: 0.0.40
codegen_flags: <defaults>
</compile_context>

<pallas_src>
import numpy as np
import jax
import jax.numpy as jnp
from jax.experimental import pallas as pl
from jax.experimental.pallas import tpu as pltpu


# -----------------------------------------------------------------------------
# Cayley–Dickson multiplication table (Hamilton-compatible for n = 4)
# -----------------------------------------------------------------------------
def _cd_conj(x):
    y = -x.copy()
    y[0] = x[0]
    return y


def _cd_mult(x, y):
    n = x.shape[0]
    if n == 1:
        return x * y
    h = n // 2
    a, b = x[:h], x[h:]
    c, d = y[:h], y[h:]
    return np.concatenate(
        [_cd_mult(a, c) - _cd_mult(_cd_conj(d), b),
         _cd_mult(d, a) + _cd_mult(b, _cd_conj(c))]
    )


def mult_table(n):
    """e_a * e_b = sign[a, b] * e_{idx[a, b]} for the 2^m-dim CD algebra."""
    idx = np.zeros((n, n), dtype=np.int32)
    sgn = np.zeros((n, n), dtype=np.float32)
    eye = np.eye(n, dtype=np.float32)
    for a in range(n):
        for b in range(n):
            p = _cd_mult(eye[a], eye[b])
            k = int(np.argmax(np.abs(p)))
            idx[a, b] = k
            sgn[a, b] = float(p[k])
    return idx, sgn


def build_hypercomplex_transpose_weight(weights):
    """Replicates the cat_kernels construction of hypercomplex_transpose_conv.

    weights: list of num_components arrays, each (in_pc, out_pc, kH, kW)
    returns: (num_components*in_pc, num_components*out_pc, kH, kW)
             i.e. the conv_transpose2d weight layout (Cin, Cout, kH, kW).
    """
    n = len(weights)
    idx, sgn = mult_table(n)
    blocks = [[None] * n for _ in range(n)]
    for c in range(n):          # which component weight
        for q in range(n):      # column (input-component) block
            p = int(idx[c, q])  # row (output-component) block
            blocks[p][q] = sgn[c, q] * weights[c]
    rows = [jnp.concatenate(blocks[p], axis=1) for p in range(n)]
    return jnp.concatenate(rows, axis=0)


# -----------------------------------------------------------------------------
# Pallas kernel: tiled (rows @ weight) matmul, bf16 in / f32 accumulate
# -----------------------------------------------------------------------------
def _matmul_kernel(a_ref, b_ref, o_ref):
    o_ref[...] = jnp.dot(a_ref[...], b_ref[...],
                         preferred_element_type=jnp.float32)


def _round_up(x, m):
    return ((x + m - 1) // m) * m


def matmul_pallas(a, b, *, tm_max=2048):
    """a: (M, K), b: (K, Np) with Np % 128 == 0 (lane-dense output).

    Returns (M, Np) float32 = a @ b with f32 accumulation on the MXU.
    B (and only B) is small and kept resident across all grid steps.
    """
    M, K = a.shape
    K2, Np = b.shape
    assert K == K2 and Np % 128 == 0

    # Large M tiles (per-step overhead amortization); keep >=4 grid steps when
    # M is big enough so double-buffering / megacore sharding can engage.
    if M <= tm_max:
        tm = _round_up(max(M, 8), 8)
    else:
        tm = tm_max
        while tm > 512 and (M + tm - 1) // tm < 4:
            tm //= 2
    Mp = _round_up(M, tm)
    if Mp != M:
        a = jnp.pad(a, ((0, Mp - M), (0, 0)))   # at most tm-1 rows, K is tiny

    out = pl.pallas_call(
        _matmul_kernel,
        out_shape=jax.ShapeDtypeStruct((Mp, Np), jnp.float32),
        grid_spec=pltpu.PrefetchScalarGridSpec(
            num_scalar_prefetch=0,
            grid=(Mp // tm,),
            in_specs=[
                pl.BlockSpec((tm, K), lambda i: (i, 0)),   # A: streamed tiles
                pl.BlockSpec((K, Np), lambda i: (0, 0)),   # B: constant block, resident
            ],
            out_specs=pl.BlockSpec((tm, Np), lambda i: (i, 0)),
        ),
        compiler_params=pltpu.CompilerParams(
            dimension_semantics=("parallel",),
            vmem_limit_bytes=32 * 1024 * 1024,
        ),
    )(a, b)
    return out[:M]


# -----------------------------------------------------------------------------
# HyperTransposeConv forward (groups == 1), scatter / col2im formulation
# -----------------------------------------------------------------------------
def hyper_transpose_conv_forward(x, weights, bias, *, stride, padding,
                                 output_padding, dilation,
                                 compute_dtype=jnp.bfloat16):
    """x: (N, Cin, H, W) -> (N, Cout, OH, OW), matching F.conv_transpose2d."""
    W_t = build_hypercomplex_transpose_weight(weights)      # (Cin, Cout, kH, kW)
    Cin, Cout, kH, kW = W_t.shape
    N, Cx, H, W = x.shape
    assert Cx == Cin
    s, p, op, d = stride, padding, output_padding, dilation

    OH = (H - 1) * s - 2 * p + d * (kH - 1) + op + 1
    OW = (W - 1) * s - 2 * p + d * (kW - 1) + op + 1

    # Weight matrix with columns ordered (kh, kw, co) so Cout is lane-minor in
    # the col2im updates; pad columns to a multiple of 128 for unmasked stores.
    w_mat = jnp.transpose(W_t, (0, 2, 3, 1)).reshape(Cin, kH * kW * Cout)
    Ncols = kH * kW * Cout
    Npad = _round_up(Ncols, 128)
    if Npad != Ncols:
        w_mat = jnp.pad(w_mat, ((0, 0), (0, Npad - Ncols)))

    # Rows = input pixels in NHWC order; no zero-dilation, no im2col expansion.
    a = jnp.transpose(x, (0, 2, 3, 1)).reshape(N * H * W, Cin)

    # bf16 operands, f32 accumulation inside the Pallas matmul (the hot path).
    cols = matmul_pallas(a.astype(compute_dtype), w_mat.astype(compute_dtype))
    cols = cols[:, :Ncols].reshape(N, H, W, kH, kW, Cout)

    # col2im scatter-add (static strided updates; cheap XLA glue in NHWC).
    Hfull = (H - 1) * s + d * (kH - 1) + 1 + op
    Wfull = (W - 1) * s + d * (kW - 1) + 1 + op
    y_full = jnp.zeros((N, Hfull, Wfull, Cout), jnp.float32)
    for kh in range(kH):
        for kw in range(kW):
            y_full = y_full.at[
                :,
                kh * d: kh * d + (H - 1) * s + 1: s,
                kw * d: kw * d + (W - 1) * s + 1: s,
                :,
            ].add(cols[:, :, :, kh, kw, :])

    # Bias is added once per output pixel, after col2im, in f32.
    y = y_full[:, p:p + OH, p:p + OW, :] \
        + bias.astype(jnp.float32)[None, None, None, :]
    return jnp.transpose(y, (0, 3, 1, 2))


def reference_forward(x, weights, bias, *, stride, padding, output_padding,
                      dilation, compute_dtype=jnp.bfloat16):
    """Independent pure-JAX reference via lax.conv_general_dilated.

    Inputs are rounded through compute_dtype so the reference checks the same
    bf16-operand / f32-accumulation numerics the Pallas path uses.
    """
    W_t = build_hypercomplex_transpose_weight(weights)
    Cin, Cout, kH, kW = W_t.shape
    s, p, op, d = stride, padding, output_padding, dilation
    W_conv = jnp.transpose(W_t, (1, 0, 2, 3))[:, :, ::-1, ::-1]
    pt = d * (kH - 1) - p
    pw = d * (kW - 1) - p
    xr = x.astype(compute_dtype).astype(jnp.float32)
    wr = W_conv.astype(compute_dtype).astype(jnp.float32)
    y = jax.lax.conv_general_dilated(
        xr, wr,
        window_strides=(1, 1),
        padding=((pt, pt + op), (pw, pw + op)),
        lhs_dilation=(s, s), rhs_dilation=(d, d),
        dimension_numbers=("NCHW", "OIHW", "NCHW"),
        precision=jax.lax.Precision.HIGHEST)
    return y + bias.astype(jnp.float32)[None, :, None, None]


# -----------------------------------------------------------------------------
if __name__ == "__main__":
    # Module config (mirrors HyperTransposeConv.__init__):
    num_components = 8
    in_channels, out_channels = 16, 16          # totals (divisible by 8)
    kernel_size, stride, padding, output_padding, dilation = 3, 2, 1, 1, 1
    in_pc = in_channels // num_components        # 2
    out_pc = out_channels // num_components      # 2
    # w_shape for the transpose variant is (in_pc, out_pc, kH, kW)

    key = jax.random.PRNGKey(0)
    keys = jax.random.split(key, num_components + 1)
    fan = in_pc * kernel_size * kernel_size * num_components
    weights = [
        jax.random.normal(keys[c], (in_pc, out_pc, kernel_size, kernel_size),
                          dtype=jnp.float32) / np.sqrt(fan)
        for c in range(num_components)
    ]
    bias = jnp.zeros((out_channels,), jnp.float32)   # reset_parameters zeroes bias

    x = jax.random.normal(keys[-1], (2, in_channels, 8, 8), dtype=jnp.float32)

    y = hyper_transpose_conv_forward(
        x, weights, bias, stride=stride, padding=padding,
        output_padding=output_padding, dilation=dilation)
    y = jax.block_until_ready(y)

    y_ref = reference_forward(
        x, weights, bias, stride=stride, padding=padding,
        output_padding=output_padding, dilation=dilation)
    y_ref = jax.block_until_ready(y_ref)

    assert y.shape == (2, out_channels, 16, 16), y.shape
    np.testing.assert_allclose(np.asarray(y), np.asarray(y_ref),
                               rtol=2e-3, atol=2e-3)
    print("KERNEL_OK")
</pallas_src>

<mosaic_0001>
module attributes {stable_mosaic.version = 11 : i64} {
  func.func @_matmul_kernel(%arg0: i32, %arg1: memref<128x16xbf16, #tpu.memory_space<vmem>>, %arg2: memref<16x256xbf16, #tpu.memory_space<vmem>>, %arg3: memref<128x256xf32, #tpu.memory_space<vmem>>) attributes {dimension_semantics = [#tpu.dimension_semantics<parallel>], iteration_bounds = array<i64: 1>, scalar_prefetch = 0 : i64, scratch_operands = 0 : i64, tpu.core_type = #tpu.core_type<tc>, window_params = [{transform_indices = @transform_0, window_bounds = array<i64: 128, 16>}, {pipeline_mode = #tpu.pipeline_mode<synchronous>, transform_indices = @transform_1, window_bounds = array<i64: 16, 256>}, {transform_indices = @transform_2, window_bounds = array<i64: 128, 256>}]} {
    %c0 = arith.constant 0 : index
    %c0_0 = arith.constant 0 : index
    %0 = vector.load %arg1[%c0, %c0_0] : memref<128x16xbf16, #tpu.memory_space<vmem>>, vector<128x16xbf16>
    %c0_1 = arith.constant 0 : index
    %c0_2 = arith.constant 0 : index
    %1 = vector.load %arg2[%c0_1, %c0_2] : memref<16x256xbf16, #tpu.memory_space<vmem>>, vector<16x256xbf16>
    %cst = arith.constant dense<0.000000e+00> : vector<128x256xf32>
    %2 = tpu.matmul %0, %1, %cst {dimension_numbers = #tpu.dot_dimension_numbers<[1], [0], [0], [1], [0, 0, 1, 1], [], []>} : vector<128x16xbf16>, vector<16x256xbf16>, vector<128x256xf32> -> vector<128x256xf32>
    %c0_3 = arith.constant 0 : index
    %c0_4 = arith.constant 0 : index
    %3 = vector.load %arg3[%c0_3, %c0_4] : memref<128x256xf32, #tpu.memory_space<vmem>>, vector<128x256xf32>
    tpu.vector_store %arg3[%c0_3, %c0_4], %2 {strides = array<i32>} : memref<128x256xf32, #tpu.memory_space<vmem>>, vector<128x256xf32>,
    return
  }
  func.func @transform_0(%arg0: i32) -> (i32, i32) {
    %c0_i32 = arith.constant 0 : i32
    %c0_i32_0 = arith.constant 0 : i32
    return %arg0, %c0_i32 : i32, i32
  }
  func.func @transform_1(%arg0: i32) -> (i32, i32) {
    %c0_i32 = arith.constant 0 : i32
    %c0_i32_0 = arith.constant 0 : i32
    %c0_i32_1 = arith.constant 0 : i32
    return %c0_i32, %c0_i32_0 : i32, i32
  }
  func.func @transform_2(%arg0: i32) -> (i32, i32) {
    %c0_i32 = arith.constant 0 : i32
    %c0_i32_0 = arith.constant 0 : i32
    return %arg0, %c0_i32 : i32, i32
  }
}

</mosaic_0001>

<llo_original>
// kernel: tpu_custom_call.1
$region0: #{tpu_custom_call.1}
  #allocation0 [shape = 'u32[]', space=smem, size = 0x4, offset = 0x4, fixed_abs, tag = 'smem constant byte address 0x4 - core index']
  #allocation1 [shape = 'u32[72,128]{1,0:T(1,128)}', space=vmem, size = 0x9000, scoped, tag = 'internal scratch']
  %s0 = inlined_call_operand.vmem [shape: bf16[128,16], index: 0, kind: input, shape index: {}]
  %s1 = inlined_call_operand.vmem [shape: bf16[16,256], index: 1, kind: input, shape index: {}]
  %s2 = inlined_call_operand.hbm [shape: f32[128,256], index: 2, kind: output, shape index: {}]
  %s3 = sld [smem:[#allocation0]]
  $region18: #{tpu_custom_call.1} parent=0
    _
  %s5 = ssub.s32 1, %s3
  %s6 = scalar_select 0, %s5, %s3
  $region1: #{tpu_custom_call.1} parent=0
    #allocation2 [shape = 'u8[131072]{0}', space=vmem, size = 0x20000, scoped, tag = 'output window, operand 0, single buffered']
    #allocation3 [shape = 's32[1]{0}', space=sflag, size = 0x4, scoped, tag = 'scoped memory for tpu_custom_call.1']
    %7 = vsyncpa [#allocation3], 0
    // Predicated region
    $region2: #{tpu_custom_call.1} parent=1 // pred_check
      _
    $region3: #{tpu_custom_call.1} parent=1 // pred_check_branch
      %9 = sbr.rel (0) target = $region5
    $region4: #{tpu_custom_call.1} parent=1 // pred_region
      _
    $region5: #{tpu_custom_call.1} parent=1 // pred_fallthru
      _
    // Predicated region
    $region6: #{tpu_custom_call.1} parent=1 // pred_check
      _
    $region7: #{tpu_custom_call.1} parent=1 // pred_check_branch
      %11 = sbr.rel (0) target = $region9
    $region8: #{tpu_custom_call.1} parent=1 // pred_region
      _
    $region9: #{tpu_custom_call.1} parent=1 // pred_fallthru
      _
    %v13 = vld [vmem:[%s0] sm:$0xf]
    %v14 = vld [vmem:[%s0 + $0x4] sm:$0xf]
    %v15 = vld [vmem:[%s0 + $0x8] sm:$0xf]
    %v16 = vld [vmem:[%s0 + $0xc] sm:$0xf]
    %v17 = vld [vmem:[%s0 + $0x10] sm:$0xf]
    %v18 = vld [vmem:[%s0 + $0x14] sm:$0xf]
    %v19 = vld [vmem:[%s0 + $0x18] sm:$0xf]
    %v20 = vld [vmem:[%s0 + $0x1c] sm:$0xf]
    %v21 = vld [vmem:[%s0 + $0x20] sm:$0xf]
    %v22 = vld [vmem:[%s0 + $0x24] sm:$0xf]
    %v23 = vld [vmem:[%s0 + $0x28] sm:$0xf]
    %v24 = vld [vmem:[%s0 + $0x2c] sm:$0xf]
    %v25 = vld [vmem:[%s0 + $0x30] sm:$0xf]
    %v26 = vld [vmem:[%s0 + $0x34] sm:$0xf]
    %v27 = vld [vmem:[%s0 + $0x38] sm:$0xf]
    %v28 = vld [vmem:[%s0 + $0x3c] sm:$0xf]
    %v29 = vld [vmem:[%s1] sm:$0xff]
    %v30 = vld [vmem:[%s1 + $0x8] sm:$0xff]
    %v47 = vunpack.c.l.b16 %v13
    %v48 = vunpack.c.l.b16 %v14
    %v49 = vunpack.c.l.b16 %v15
    %v50 = vunpack.c.l.b16 %v16
    %v51 = vunpack.c.l.b16 %v17
    %v52 = vunpack.c.l.b16 %v18
    %v53 = vunpack.c.l.b16 %v19
    %v54 = vunpack.c.l.b16 %v20
    %v55 = vunpack.c.l.b16 %v21
    %v56 = vunpack.c.l.b16 %v22
    %v57 = vunpack.c.l.b16 %v23
    %v58 = vunpack.c.l.b16 %v24
    %v59 = vunpack.c.l.b16 %v25
    %v60 = vunpack.c.l.b16 %v26
    %v61 = vunpack.c.l.b16 %v27
    %v62 = vunpack.c.l.b16 %v28
    %v63 = vpack.c.b16 %v48, %v47
    %v64 = vpack.c.b16 %v50, %v49
    %v65 = vpack.c.b16 %v52, %v51
    %v66 = vpack.c.b16 %v54, %v53
    %v67 = vpack.c.b16 %v56, %v55
    %v68 = vpack.c.b16 %v58, %v57
    %v69 = vpack.c.b16 %v60, %v59
    %v70 = vpack.c.b16 %v62, %v61
    %v73 = vunpack.c.l.b16 %v29
    %v74 = vunpack.c.h.b16 %v29
    %v75 = vunpack.c.l.b16 %v30
    %v76 = vunpack.c.h.b16 %v30
    %v77 = vpack.c.b16 %v75, %v73
    %v78 = vpack.c.b16 %v76, %v74
    %vm81 = vcmask 130048
    %v83 = vsel %vm81, %v63, 0
    %v86 = vsel %vm81, %v64, 0
    %v89 = vsel %vm81, %v65, 0
    %v92 = vsel %vm81, %v66, 0
    %v95 = vsel %vm81, %v67, 0
    %v98 = vsel %vm81, %v68, 0
    %v101 = vsel %vm81, %v69, 0
    %v104 = vsel %vm81, %v70, 0
    %106 = vmatpush.bf16.msra.mxu0 0
    %107 = vmatpush.bf16.msra.mxu0 0
    %108 = vmatpush.bf16.msra.mxu0 0
    %109 = vmatpush.bf16.msra.mxu0 0
    %110 = vmatpush.bf16.msra.mxu0 0
    %111 = vmatpush.bf16.msra.mxu0 0
    %112 = vmatpush.bf16.msra.mxu0 0
    %113 = vmatpush.bf16.msra.mxu0 %v77
    %114 = vmatmul.bf16.gmra.mxu0 %v83
    %v115 = vpop.f32.mrf.mxu0
    %v116 = vadd.f32 0.0, %v115
    %v117 = vpop.f32.mrf.mxu0
    %v118 = vadd.f32 0.0, %v117
    %119 = vmatmul.bf16.gmra.mxu0 %v86
    %v120 = vpop.f32.mrf.mxu0
    %v121 = vadd.f32 0.0, %v120
    %v122 = vpop.f32.mrf.mxu0
    %v123 = vadd.f32 0.0, %v122
    %124 = vmatmul.bf16.gmra.mxu0 %v89
    %v125 = vpop.f32.mrf.mxu0
    %v126 = vadd.f32 0.0, %v125
    %v127 = vpop.f32.mrf.mxu0
    %v128 = vadd.f32 0.0, %v127
    %129 = vmatmul.bf16.gmra.mxu0 %v92
    %v130 = vpop.f32.mrf.mxu0
    %v131 = vadd.f32 0.0, %v130
    %v132 = vpop.f32.mrf.mxu0
    %v133 = vadd.f32 0.0, %v132
    %134 = vmatmul.bf16.gmra.mxu0 %v95
    %v135 = vpop.f32.mrf.mxu0
    %v136 = vadd.f32 0.0, %v135
    %v137 = vpop.f32.mrf.mxu0
    %v138 = vadd.f32 0.0, %v137
    %139 = vmatmul.bf16.gmra.mxu0 %v98
    %v140 = vpop.f32.mrf.mxu0
    %v141 = vadd.f32 0.0, %v140
    %v142 = vpop.f32.mrf.mxu0
    %v143 = vadd.f32 0.0, %v142
    %144 = vmatmul.bf16.gmra.mxu0 %v101
    %v145 = vpop.f32.mrf.mxu0
    %v146 = vadd.f32 0.0, %v145
    %v147 = vpop.f32.mrf.mxu0
    %v148 = vadd.f32 0.0, %v147
    %149 = vmatmul.bf16.gmra.mxu0 %v104
    %v150 = vpop.f32.mrf.mxu0
    %v151 = vadd.f32 0.0, %v150
    %v152 = vpop.f32.mrf.mxu0
    %v153 = vadd.f32 0.0, %v152
    %154 = vdwg.mxu0
    %155 = vmatpush.bf16.msra.mxu0 0
    %156 = vmatpush.bf16.msra.mxu0 0
    %157 = vmatpush.bf16.msra.mxu0 0
    %158 = vmatpush.bf16.msra.mxu0 0
    %159 = vmatpush.bf16.msra.mxu0 0
    %160 = vmatpush.bf16.msra.mxu0 0
    %161 = vmatpush.bf16.msra.mxu0 0
    %162 = vmatpush.bf16.msra.mxu0 %v78
    %163 = vmatmul.bf16.gmra.mxu0 %v83
    %v164 = vpop.f32.mrf.mxu0
    %v165 = vadd.f32 0.0, %v164
    %v166 = vpop.f32.mrf.mxu0
    %v167 = vadd.f32 0.0, %v166
    %168 = vmatmul.bf16.gmra.mxu0 %v86
    %v169 = vpop.f32.mrf.mxu0
    %v170 = vadd.f32 0.0, %v169
    %v171 = vpop.f32.mrf.mxu0
    %v172 = vadd.f32 0.0, %v171
    %173 = vmatmul.bf16.gmra.mxu0 %v89
    %v174 = vpop.f32.mrf.mxu0
    %v175 = vadd.f32 0.0, %v174
    %v176 = vpop.f32.mrf.mxu0
    %v177 = vadd.f32 0.0, %v176
    %178 = vmatmul.bf16.gmra.mxu0 %v92
    %v179 = vpop.f32.mrf.mxu0
    %v180 = vadd.f32 0.0, %v179
    %v181 = vpop.f32.mrf.mxu0
    %v182 = vadd.f32 0.0, %v181
    %183 = vmatmul.bf16.gmra.mxu0 %v95
    %v184 = vpop.f32.mrf.mxu0
    %v185 = vadd.f32 0.0, %v184
    %v186 = vpop.f32.mrf.mxu0
    %v187 = vadd.f32 0.0, %v186
    %188 = vmatmul.bf16.gmra.mxu0 %v98
    %v189 = vpop.f32.mrf.mxu0
    %v190 = vadd.f32 0.0, %v189
    %v191 = vpop.f32.mrf.mxu0
    %v192 = vadd.f32 0.0, %v191
    %193 = vmatmul.bf16.gmra.mxu0 %v101
    %v194 = vpop.f32.mrf.mxu0
    %v195 = vadd.f32 0.0, %v194
    %v196 = vpop.f32.mrf.mxu0
    %v197 = vadd.f32 0.0, %v196
    %198 = vmatmul.bf16.gmra.mxu0 %v104
    %v199 = vpop.f32.mrf.mxu0
    %v200 = vadd.f32 0.0, %v199
    %v201 = vpop.f32.mrf.mxu0
    %v202 = vadd.f32 0.0, %v201
    %203 = vdwg.mxu0
    %204 = vst [vmem:[#allocation2] sm:$0xff] %v116
    %205 = vst [vmem:[#allocation2 + $0x8] sm:$0xff] %v165
    %206 = vst [vmem:[#allocation2 + $0x10] sm:$0xff] %v118
    %207 = vst [vmem:[#allocation2 + $0x18] sm:$0xff] %v167
    %208 = vst [vmem:[#allocation2 + $0x20] sm:$0xff] %v121
    %209 = vst [vmem:[#allocation2 + $0x28] sm:$0xff] %v170
    %210 = vst [vmem:[#allocation2 + $0x30] sm:$0xff] %v123
    %211 = vst [vmem:[#allocation2 + $0x38] sm:$0xff] %v172
    %212 = vst [vmem:[#allocation2 + $0x40] sm:$0xff] %v126
    %213 = vst [vmem:[#allocation2 + $0x48] sm:$0xff] %v175
    %214 = vst [vmem:[#allocation2 + $0x50] sm:$0xff] %v128
    %215 = vst [vmem:[#allocation2 + $0x58] sm:$0xff] %v177
    %216 = vst [vmem:[#allocation2 + $0x60] sm:$0xff] %v131
    %217 = vst [vmem:[#allocation2 + $0x68] sm:$0xff] %v180
    %218 = vst [vmem:[#allocation2 + $0x70] sm:$0xff] %v133
    %219 = vst [vmem:[#allocation2 + $0x78] sm:$0xff] %v182
    %220 = vst [vmem:[#allocation2 + $0x80] sm:$0xff] %v136
    %221 = vst [vmem:[#allocation2 + $0x88] sm:$0xff] %v185
    %222 = vst [vmem:[#allocation2 + $0x90] sm:$0xff] %v138
    %223 = vst [vmem:[#allocation2 + $0x98] sm:$0xff] %v187
    %224 = vst [vmem:[#allocation2 + $0xa0] sm:$0xff] %v141
    %225 = vst [vmem:[#allocation2 + $0xa8] sm:$0xff] %v190
    %226 = vst [vmem:[#allocation2 + $0xb0] sm:$0xff] %v143
    %227 = vst [vmem:[#allocation2 + $0xb8] sm:$0xff] %v192
    %228 = vst [vmem:[#allocation2 + $0xc0] sm:$0xff] %v146
    %229 = vst [vmem:[#allocation2 + $0xc8] sm:$0xff] %v195
    %230 = vst [vmem:[#allocation2 + $0xd0] sm:$0xff] %v148
    %231 = vst [vmem:[#allocation2 + $0xd8] sm:$0xff] %v197
    %232 = vst [vmem:[#allocation2 + $0xe0] sm:$0xff] %v151
    %233 = vst [vmem:[#allocation2 + $0xe8] sm:$0xff] %v200
    %234 = vst [vmem:[#allocation2 + $0xf0] sm:$0xff] %v153
    %235 = vst [vmem:[#allocation2 + $0xf8] sm:$0xff] %v202
    // Predicated region
    $region10: #{tpu_custom_call.1} parent=1 // pred_check
      _
    $region11: #{tpu_custom_call.1} parent=1 // pred_check_branch
      %237 = sbr.rel (0) target = $region13
    $region12: #{tpu_custom_call.1} parent=1 // pred_region
      %239 = vsyncadd [#allocation3], 0
      %s240 = sshll.u32 [#allocation2], 4
      %s241 = int_to_ptr.vmem [resolvable:$true] %s240
      %s242 = sshll.u32 %s2, 4
      %s243 = int_to_ptr.hbm [resolvable:$true] %s242
      %248 = dma.vmem_to_hbm [thread:$0]  %s241, 4096, %s243, [#allocation3], 256, 256, 16
    $region13: #{tpu_custom_call.1} parent=1 // pred_fallthru
      _
    // Predicated region
    $region14: #{tpu_custom_call.1} parent=1 // pred_check
      _
    $region15: #{tpu_custom_call.1} parent=1 // pred_check_branch
      %250 = sbr.rel (0) target = $region17
    $region16: #{tpu_custom_call.1} parent=1 // pred_region
      %252 = dma.done [#allocation3], 4096
    $region17: #{tpu_custom_call.1} parent=1 // pred_fallthru
      _
    %253 = vsyncpa [#allocation3], 1

</llo_original>
